<compile_context>
chip_gen: v6e
topology: v6e:2x2x1
jax: 0.10.0
libtpu: 0.0.40
codegen_flags: <defaults>
</compile_context>

<pallas_src>
import jax
import jax.numpy as jnp
from jax.experimental import pallas as pl
from jax.experimental.pallas import tpu as pltpu


def pos2d_kernel(row_ref, col_ref, out_ref):
    # row_ref: (bh, D)  col_ref: (W, D)  out_ref: (bh, W*D) lane-dense slab
    # out[h, w*D + d] = row[h, d] + col[w, d]
    row = row_ref[...]                     # (bh, D)
    col = col_ref[...]                     # (W, D)
    W, D = col.shape                       # static, compile-time
    # Static unroll over W: each iteration writes one contiguous D-wide lane
    # slice of the lane-dense output block (pure VPU broadcast-add, no MXU).
    for w in range(W):
        out_ref[:, w * D:(w + 1) * D] = row + col[w:w + 1, :]


def _pick_block_h(H: int, target: int = 512) -> int:
    """Row-tile size: full slab for small H, else a multiple-of-8 divisor ~target."""
    if H <= target or H % 8 != 0:
        return H
    bh = target - (target % 8)
    while H % bh != 0:
        bh -= 8
    return max(bh, 8)


def position_2d_encoder(row_embed: jax.Array, col_embed: jax.Array, batch_size: int):
    """row_embed: (H, D), col_embed: (W, D) -> (B, H*W, D)"""
    H, D = row_embed.shape
    W, D2 = col_embed.shape
    assert D == D2
    WD = W * D

    bh = _pick_block_h(H)
    grid = (H // bh,)

    slab = pl.pallas_call(
        pos2d_kernel,
        out_shape=jax.ShapeDtypeStruct((H, WD), row_embed.dtype),
        grid=grid,
        in_specs=[
            pl.BlockSpec((bh, D), lambda i: (i, 0)),   # row-embedding tile
            pl.BlockSpec((W, D), lambda i: (0, 0)),    # full col table (constant index -> no re-DMA)
        ],
        out_specs=pl.BlockSpec((bh, WD), lambda i: (i, 0)),
        compiler_params=pltpu.CompilerParams(dimension_semantics=("parallel",)),
    )(row_embed, col_embed)

    # Glue: (H, W*D) -> (H*W, D) matches torch's reshape(-1, D); the batch
    # expand is a view in torch, so it is a free broadcast outside the kernel.
    pos = slab.reshape(H * W, D)
    return jnp.broadcast_to(pos[None, :, :], (batch_size, H * W, D))


if __name__ == "__main__":
    # Small shapes consistent with the module: num_patches = height * width
    batch_size = 2
    height, width, dim = 4, 4, 32
    num_patches = height * width

    key = jax.random.PRNGKey(0)
    k_row, k_col = jax.random.split(key)
    # nn.Embedding default init ~ N(0, 1), done deterministically in-script
    row_embed = jax.random.normal(k_row, (height, dim), dtype=jnp.float32)
    col_embed = jax.random.normal(k_col, (width, dim), dtype=jnp.float32)

    pos = position_2d_encoder(row_embed, col_embed, batch_size)
    pos = jax.block_until_ready(pos)

    # Pure-JAX reference check of the forward semantics
    ref = (row_embed[:, None, :] + col_embed[None, :, :]).reshape(num_patches, dim)
    ref = jnp.broadcast_to(ref[None], (batch_size, num_patches, dim))

    assert pos.shape == (batch_size, num_patches, dim)
    assert pos.dtype == jnp.float32
    assert jnp.allclose(pos, ref, atol=1e-6, rtol=1e-6)

    print("KERNEL_OK")
</pallas_src>

<mosaic_0001>
module attributes {stable_mosaic.version = 11 : i64} {
  func.func @pos2d_kernel(%arg0: i32, %arg1: memref<4x32xf32, #tpu.memory_space<vmem>>, %arg2: memref<4x32xf32, #tpu.memory_space<vmem>>, %arg3: memref<4x128xf32, #tpu.memory_space<vmem>>) attributes {dimension_semantics = [#tpu.dimension_semantics<parallel>], iteration_bounds = array<i64: 1>, scalar_prefetch = 0 : i64, scratch_operands = 0 : i64, tpu.core_type = #tpu.core_type<tc>, window_params = [{transform_indices = @transform_0, window_bounds = array<i64: 4, 32>}, {pipeline_mode = #tpu.pipeline_mode<synchronous>, transform_indices = @transform_1, window_bounds = array<i64: 4, 32>}, {transform_indices = @transform_2, window_bounds = array<i64: 4, 128>}]} {
    %c0 = arith.constant 0 : index
    %c0_0 = arith.constant 0 : index
    %0 = vector.load %arg1[%c0, %c0_0] : memref<4x32xf32, #tpu.memory_space<vmem>>, vector<4x32xf32>
    %c0_1 = arith.constant 0 : index
    %c0_2 = arith.constant 0 : index
    %1 = vector.load %arg2[%c0_1, %c0_2] : memref<4x32xf32, #tpu.memory_space<vmem>>, vector<4x32xf32>
    %2 = vector.extract_strided_slice %1 {offsets = [0, 0], sizes = [1, 32], strides = [1, 1]} : vector<4x32xf32> to vector<1x32xf32>
    %3 = vector.broadcast %2 : vector<1x32xf32> to vector<4x32xf32>
    %4 = arith.addf %0, %3 : vector<4x32xf32>
    %c0_3 = arith.constant 0 : index
    %c0_4 = arith.constant 0 : index
    %5 = vector.load %arg3[%c0_3, %c0_4] : memref<4x128xf32, #tpu.memory_space<vmem>>, vector<4x32xf32>
    tpu.vector_store %arg3[%c0_3, %c0_4], %4 {strides = array<i32>} : memref<4x128xf32, #tpu.memory_space<vmem>>, vector<4x32xf32>,
    %6 = vector.extract_strided_slice %1 {offsets = [1, 0], sizes = [1, 32], strides = [1, 1]} : vector<4x32xf32> to vector<1x32xf32>
    %7 = vector.broadcast %6 : vector<1x32xf32> to vector<4x32xf32>
    %8 = arith.addf %0, %7 : vector<4x32xf32>
    %c0_5 = arith.constant 0 : index
    %c32 = arith.constant 32 : index
    %9 = vector.load %arg3[%c0_5, %c32] : memref<4x128xf32, #tpu.memory_space<vmem>>, vector<4x32xf32>
    tpu.vector_store %arg3[%c0_5, %c32], %8 {strides = array<i32>} : memref<4x128xf32, #tpu.memory_space<vmem>>, vector<4x32xf32>,
    %10 = vector.extract_strided_slice %1 {offsets = [2, 0], sizes = [1, 32], strides = [1, 1]} : vector<4x32xf32> to vector<1x32xf32>
    %11 = vector.broadcast %10 : vector<1x32xf32> to vector<4x32xf32>
    %12 = arith.addf %0, %11 : vector<4x32xf32>
    %c0_6 = arith.constant 0 : index
    %c64 = arith.constant 64 : index
    %13 = vector.load %arg3[%c0_6, %c64] : memref<4x128xf32, #tpu.memory_space<vmem>>, vector<4x32xf32>
    tpu.vector_store %arg3[%c0_6, %c64], %12 {strides = array<i32>} : memref<4x128xf32, #tpu.memory_space<vmem>>, vector<4x32xf32>,
    %14 = vector.extract_strided_slice %1 {offsets = [3, 0], sizes = [1, 32], strides = [1, 1]} : vector<4x32xf32> to vector<1x32xf32>
    %15 = vector.broadcast %14 : vector<1x32xf32> to vector<4x32xf32>
    %16 = arith.addf %0, %15 : vector<4x32xf32>
    %c0_7 = arith.constant 0 : index
    %c96 = arith.constant 96 : index
    %17 = vector.load %arg3[%c0_7, %c96] : memref<4x128xf32, #tpu.memory_space<vmem>>, vector<4x32xf32>
    tpu.vector_store %arg3[%c0_7, %c96], %16 {strides = array<i32>} : memref<4x128xf32, #tpu.memory_space<vmem>>, vector<4x32xf32>,
    return
  }
  func.func @transform_0(%arg0: i32) -> (i32, i32) {
    %c0_i32 = arith.constant 0 : i32
    %c0_i32_0 = arith.constant 0 : i32
    return %arg0, %c0_i32 : i32, i32
  }
  func.func @transform_1(%arg0: i32) -> (i32, i32) {
    %c0_i32 = arith.constant 0 : i32
    %c0_i32_0 = arith.constant 0 : i32
    %c0_i32_1 = arith.constant 0 : i32
    return %c0_i32, %c0_i32_0 : i32, i32
  }
  func.func @transform_2(%arg0: i32) -> (i32, i32) {
    %c0_i32 = arith.constant 0 : i32
    %c0_i32_0 = arith.constant 0 : i32
    return %arg0, %c0_i32 : i32, i32
  }
}

</mosaic_0001>

<llo_original>
// kernel: tpu_custom_call.1
$region0: #{tpu_custom_call.1}
  #allocation0 [shape = 'u32[]', space=smem, size = 0x4, offset = 0x4, fixed_abs, tag = 'smem constant byte address 0x4 - core index']
  #allocation1 [shape = 'u32[144,128]{1,0:T(1,128)}', space=vmem, size = 0x12000, scoped, tag = 'internal scratch']
  %s0 = inlined_call_operand.hbm [shape: f32[4,32], index: 0, kind: input, shape index: {}]
  %s1 = inlined_call_operand.hbm [shape: f32[4,32], index: 1, kind: input, shape index: {}]
  %s2 = inlined_call_operand.hbm [shape: f32[4,128], index: 2, kind: output, shape index: {}]
  %s3 = sld [smem:[#allocation0]]
  $region26: #{tpu_custom_call.1} parent=0
    _
  %s5 = ssub.s32 1, %s3
  %s6 = scalar_select 0, %s5, %s3
  $region1: #{tpu_custom_call.1} parent=0
    #allocation2 [shape = 'u8[2048]{0}', space=vmem, size = 0x800, scoped, tag = 'input window, operand 0, single buffered']
    #allocation3 [shape = 's32[1]{0}', space=sflag, size = 0x4, scoped, tag = 'scoped memory for tpu_custom_call.1']
    #allocation4 [shape = 's32[1]{0}', space=sflag, size = 0x4, scoped, tag = 'scoped memory for tpu_custom_call.1']
    #allocation5 [shape = 'u8[2048]{0}', space=vmem, size = 0x800, scoped, tag = 'input window, operand 1, single buffered']
    #allocation6 [shape = 's32[1]{0}', space=sflag, size = 0x4, scoped, tag = 'scoped memory for tpu_custom_call.1']
    #allocation7 [shape = 'u8[2048]{0}', space=vmem, size = 0x800, scoped, tag = 'output window, operand 0, single buffered']
    %7 = vsyncpa [#allocation3], 0
    %8 = vsyncpa [#allocation6], 0
    %9 = vsyncpa [#allocation4], 0
    // Predicated region
    $region2: #{tpu_custom_call.1} parent=1 // pred_check
      _
    $region3: #{tpu_custom_call.1} parent=1 // pred_check_branch
      %11 = sbr.rel (0) target = $region5
    $region4: #{tpu_custom_call.1} parent=1 // pred_region
      %s13 = ssub.s32 64, 64
      %14 = vsyncadd [#allocation3], %s13
      %s16 = sshll.u32 [#allocation2], 4
      %s17 = int_to_ptr.vmem [resolvable:$true] %s16
      %19 = dma.hbm_to_vmem [thread:$0]  %s0, 64, %s17, [#allocation3]
    $region5: #{tpu_custom_call.1} parent=1 // pred_fallthru
      _
    // Predicated region
    $region6: #{tpu_custom_call.1} parent=1 // pred_check
      _
    $region7: #{tpu_custom_call.1} parent=1 // pred_check_branch
      %21 = sbr.rel (0) target = $region9
    $region8: #{tpu_custom_call.1} parent=1 // pred_region
      %s23 = ssub.s32 64, 64
      %24 = vsyncadd [#allocation6], %s23
      %s26 = sshll.u32 [#allocation5], 4
      %s27 = int_to_ptr.vmem [resolvable:$true] %s26
      %29 = dma.hbm_to_vmem [thread:$0]  %s1, 64, %s27, [#allocation6]
    $region9: #{tpu_custom_call.1} parent=1 // pred_fallthru
      _
    // Predicated region
    $region10: #{tpu_custom_call.1} parent=1 // pred_check
      _
    $region11: #{tpu_custom_call.1} parent=1 // pred_check_branch
      %31 = sbr.rel (0) target = $region13
    $region12: #{tpu_custom_call.1} parent=1 // pred_region
      %32 = dma.done [#allocation3], 64
    $region13: #{tpu_custom_call.1} parent=1 // pred_fallthru
      _
    // Predicated region
    $region14: #{tpu_custom_call.1} parent=1 // pred_check
      _
    $region15: #{tpu_custom_call.1} parent=1 // pred_check_branch
      %34 = sbr.rel (0) target = $region17
    $region16: #{tpu_custom_call.1} parent=1 // pred_region
      %35 = dma.done [#allocation6], 64
    $region17: #{tpu_custom_call.1} parent=1 // pred_fallthru
      _
    %v36 = vld [vmem:[#allocation2] sm:$0xf]
    %v37 = vld [vmem:[#allocation5] sm:$0xf]
    %v38 = vlaneseq
    %v39 = vshrl.u32 %v38, 7
    %v40 = vsub.s32 0, %v39
    %v41 = vrot.slane %v37, %v40
    %v42 = vadd.f32 %v36, %v41
    %vm43 = vcmask 257024
    %44 = vst.msk [vmem:[#allocation7] sm:$0xf] %vm43, %v42
    %v45 = vlaneseq
    %v46 = vshrl.u32 %v45, 7
    %v47 = vsub.s32 1, %v46
    %v48 = vrot.slane %v37, %v47
    %v49 = vadd.f32 %v36, %v48
    %51 = vrot.lane.b32.xlu0 %v49, 32
    %v52 = vpop.permute.xlu0 %51
    %vm54 = vcmask 519424
    %55 = vst.msk [vmem:[#allocation7] sm:$0xf] %vm54, %v52
    %v56 = vlaneseq
    %v57 = vshrl.u32 %v56, 7
    %v58 = vsub.s32 2, %v57
    %v59 = vrot.slane %v37, %v58
    %v60 = vadd.f32 %v36, %v59
    %62 = vrot.lane.b32.xlu0 %v60, 64
    %v63 = vpop.permute.xlu0 %62
    %vm65 = vcmask 781824
    %66 = vst.msk [vmem:[#allocation7] sm:$0xf] %vm65, %v63
    %v67 = vlaneseq
    %v68 = vshrl.u32 %v67, 7
    %v69 = vsub.s32 3, %v68
    %v70 = vrot.slane %v37, %v69
    %v71 = vadd.f32 %v36, %v70
    %73 = vrot.lane.b32.xlu0 %v71, 96
    %v74 = vpop.permute.xlu0 %73
    %vm76 = vcmask 1044224
    %77 = vst.msk [vmem:[#allocation7] sm:$0xf] %vm76, %v74
    // Predicated region
    $region18: #{tpu_custom_call.1} parent=1 // pred_check
      _
    $region19: #{tpu_custom_call.1} parent=1 // pred_check_branch
      %79 = sbr.rel (0) target = $region21
    $region20: #{tpu_custom_call.1} parent=1 // pred_region
      %s81 = ssub.s32 64, 64
      %82 = vsyncadd [#allocation4], %s81
      %s84 = sshll.u32 [#allocation7], 4
      %s85 = int_to_ptr.vmem [resolvable:$true] %s84
      %87 = dma.vmem_to_hbm [thread:$0]  %s85, 64, %s2, [#allocation4]
    $region21: #{tpu_custom_call.1} parent=1 // pred_fallthru
      _
    // Predicated region
    $region22: #{tpu_custom_call.1} parent=1 // pred_check
      _
    $region23: #{tpu_custom_call.1} parent=1 // pred_check_branch
      %89 = sbr.rel (0) target = $region25
    $region24: #{tpu_custom_call.1} parent=1 // pred_region
      %90 = dma.done [#allocation4], 64
    $region25: #{tpu_custom_call.1} parent=1 // pred_fallthru
      _
    %91 = vsyncpa [#allocation3], 1
    %92 = vsyncpa [#allocation6], 1
    %93 = vsyncpa [#allocation4], 1

</llo_original>
